<compile_context>
chip_gen: v7x
topology: tpu7x:2x2x1
jax: 0.10.0
libtpu: 0.0.40
codegen_flags: <defaults>
</compile_context>

<pallas_src>
import functools

import jax
import jax.numpy as jnp
from jax.experimental import pallas as pl
from jax.experimental.pallas import tpu as pltpu


def critic_kernel(x_ref, w1_ref, b1_ref, w2_ref, b2_ref, out_ref):
    # x_ref : (TB, state_dim)       -- streamed batch tile (batch on sublanes)
    # w1_ref: (state_dim, NN_width) -- resident
    # b1_ref: (1, NN_width)         -- resident, broadcasts over the batch rows
    # w2_ref: (NN_width, 1)         -- resident
    # b2_ref: (1, 1) scalar in SMEM
    # out_ref: (TB, 1)
    h = jnp.dot(x_ref[...], w1_ref[...],
                preferred_element_type=jnp.float32)           # (TB, NN_width), MXU
    h = jnp.tanh(h + b1_ref[...])                             # bias bcast + EUP tanh
    v = jnp.dot(h, w2_ref[...],
                preferred_element_type=jnp.float32)           # (TB, 1)
    out_ref[...] = v + b2_ref[0, 0]                           # SMEM scalar bias


def _round_up(x, m):
    return ((x + m - 1) // m) * m


@functools.partial(jax.jit, static_argnames=("max_tile",))
def critic_forward(state, w1, b1, w2, b2, *, max_tile=4096):
    """state: (B, state_dim) f32. w1: (state_dim, NN_width), b1: (NN_width,),
    w2: (NN_width, 1), b2: (1,).  Returns (B, 1) f32 == PyTorch Critic.forward."""
    B, state_dim = state.shape
    NN_width = w1.shape[1]

    SUB = 8  # sublane granularity
    # Batch rows per tile: multiple of 8, large enough that the ~0.35us/step
    # pipeline overhead is amortised, small enough that the double-buffered
    # blocks stay far under the scoped VMEM limit on every chip generation.
    TB = min(_round_up(max_tile, SUB), _round_up(B, SUB))
    grid = (pl.cdiv(B, TB),)  # partial boundary block handled by Pallas

    # Layout plumbing on the tiny parameter arrays only (no copies of `state`).
    b1_row = b1.reshape(1, NN_width)
    w2_col = w2.reshape(NN_width, 1)
    b2_2d = b2.reshape(1, 1)

    out = pl.pallas_call(
        critic_kernel,
        out_shape=jax.ShapeDtypeStruct((B, 1), jnp.float32),
        grid=grid,
        in_specs=[
            pl.BlockSpec((TB, state_dim), lambda i: (i, 0)),        # streamed
            pl.BlockSpec((state_dim, NN_width), lambda i: (0, 0)),  # resident
            pl.BlockSpec((1, NN_width), lambda i: (0, 0)),          # resident
            pl.BlockSpec((NN_width, 1), lambda i: (0, 0)),          # resident
            pl.BlockSpec(memory_space=pltpu.MemorySpace.SMEM),      # scalar b2
        ],
        out_specs=pl.BlockSpec((TB, 1), lambda i: (i, 0)),
        compiler_params=pltpu.CompilerParams(
            # v7x: shard batch tiles across the 2 TensorCores; harmless on v5e/v6e.
            dimension_semantics=("parallel",),
        ),
    )(state, w1, b1_row, w2_col, b2_2d)

    return out


def _ref_forward(state, w1, b1, w2, b2):
    # Pure-JAX reference, mirrors the PyTorch forward exactly.
    x = jnp.tanh(state @ w1 + b1)
    return x @ w2 + b2


if __name__ == "__main__":
    key = jax.random.PRNGKey(0)
    B, state_dim, NN_width = 8, 16, 32

    k_s, k_w1, k_b1, k_w2, k_b2 = jax.random.split(key, 5)
    state = jax.random.normal(k_s, (B, state_dim), dtype=jnp.float32)

    # Deterministic parameter init (mimics nn.Linear's uniform(-1/sqrt(fan_in), ...)).
    bound1 = 1.0 / (state_dim ** 0.5)
    w1 = jax.random.uniform(k_w1, (state_dim, NN_width), jnp.float32, -bound1, bound1)
    b1 = jax.random.uniform(k_b1, (NN_width,), jnp.float32, -bound1, bound1)
    bound2 = 1.0 / (NN_width ** 0.5)
    w2 = jax.random.uniform(k_w2, (NN_width, 1), jnp.float32, -bound2, bound2)
    b2 = jax.random.uniform(k_b2, (1,), jnp.float32, -bound2, bound2)

    value = critic_forward(state, w1, b1, w2, b2)
    value = jax.block_until_ready(value)

    ref = _ref_forward(state, w1, b1, w2, b2)
    assert value.shape == (B, 1)
    assert jnp.allclose(value, ref, atol=1e-5, rtol=1e-5), "mismatch vs reference"

    print("KERNEL_OK")
</pallas_src>

<mosaic_0001>
module attributes {stable_mosaic.version = 11 : i64} {
  func.func @critic_kernel(%arg0: i32, %arg1: memref<8x16xf32, #tpu.memory_space<vmem>>, %arg2: memref<16x32xf32, #tpu.memory_space<vmem>>, %arg3: memref<1x32xf32, #tpu.memory_space<vmem>>, %arg4: memref<32x1xf32, #tpu.memory_space<vmem>>, %arg5: memref<1x1xf32, #tpu.memory_space<smem>>, %arg6: memref<8x1xf32, #tpu.memory_space<vmem>>) attributes {dimension_semantics = [#tpu.dimension_semantics<parallel>], iteration_bounds = array<i64: 1>, scalar_prefetch = 0 : i64, scratch_operands = 0 : i64, tpu.core_type = #tpu.core_type<tc>, window_params = [{transform_indices = @transform_0, window_bounds = array<i64: 8, 16>}, {pipeline_mode = #tpu.pipeline_mode<synchronous>, transform_indices = @transform_1, window_bounds = array<i64: 16, 32>}, {pipeline_mode = #tpu.pipeline_mode<synchronous>, transform_indices = @transform_2, window_bounds = array<i64: 1, 32>}, {pipeline_mode = #tpu.pipeline_mode<synchronous>, transform_indices = @transform_3, window_bounds = array<i64: 32, 1>}, {transform_indices = @transform_4, window_bounds = array<i64: 1, 1>}, {transform_indices = @transform_5, window_bounds = array<i64: 8, 1>}]} {
    %c0 = arith.constant 0 : index
    %c0_0 = arith.constant 0 : index
    %0 = vector.load %arg1[%c0, %c0_0] : memref<8x16xf32, #tpu.memory_space<vmem>>, vector<8x16xf32>
    %c0_1 = arith.constant 0 : index
    %c0_2 = arith.constant 0 : index
    %1 = vector.load %arg2[%c0_1, %c0_2] : memref<16x32xf32, #tpu.memory_space<vmem>>, vector<16x32xf32>
    %cst = arith.constant dense<0.000000e+00> : vector<8x32xf32>
    %2 = tpu.matmul %0, %1, %cst {dimension_numbers = #tpu.dot_dimension_numbers<[1], [0], [0], [1], [0, 0, 1, 1], [], []>} : vector<8x16xf32>, vector<16x32xf32>, vector<8x32xf32> -> vector<8x32xf32>
    %c0_3 = arith.constant 0 : index
    %c0_4 = arith.constant 0 : index
    %3 = vector.load %arg3[%c0_3, %c0_4] : memref<1x32xf32, #tpu.memory_space<vmem>>, vector<1x32xf32>
    %4 = vector.broadcast %3 : vector<1x32xf32> to vector<8x32xf32>
    %5 = arith.addf %2, %4 : vector<8x32xf32>
    %6 = math.tanh %5 : vector<8x32xf32>
    %c0_5 = arith.constant 0 : index
    %c0_6 = arith.constant 0 : index
    %7 = vector.load %arg4[%c0_5, %c0_6] : memref<32x1xf32, #tpu.memory_space<vmem>>, vector<32x1xf32>
    %cst_7 = arith.constant dense<0.000000e+00> : vector<8x1xf32>
    %8 = tpu.matmul %6, %7, %cst_7 {dimension_numbers = #tpu.dot_dimension_numbers<[1], [0], [0], [1], [0, 0, 1, 1], [], []>} : vector<8x32xf32>, vector<32x1xf32>, vector<8x1xf32> -> vector<8x1xf32>
    %c0_8 = arith.constant 0 : index
    %c0_9 = arith.constant 0 : index
    %9 = memref.load %arg5[%c0_8, %c0_9] : memref<1x1xf32, #tpu.memory_space<smem>>
    %10 = vector.broadcast %9 : f32 to vector<8x1xf32>
    %11 = arith.addf %8, %10 : vector<8x1xf32>
    %c0_10 = arith.constant 0 : index
    %c0_11 = arith.constant 0 : index
    %12 = vector.load %arg6[%c0_10, %c0_11] : memref<8x1xf32, #tpu.memory_space<vmem>>, vector<8x1xf32>
    tpu.vector_store %arg6[%c0_10, %c0_11], %11 {strides = array<i32>} : memref<8x1xf32, #tpu.memory_space<vmem>>, vector<8x1xf32>,
    return
  }
  func.func @transform_0(%arg0: i32) -> (i32, i32) {
    %c0_i32 = arith.constant 0 : i32
    %c0_i32_0 = arith.constant 0 : i32
    return %arg0, %c0_i32 : i32, i32
  }
  func.func @transform_1(%arg0: i32) -> (i32, i32) {
    %c0_i32 = arith.constant 0 : i32
    %c0_i32_0 = arith.constant 0 : i32
    %c0_i32_1 = arith.constant 0 : i32
    return %c0_i32, %c0_i32_0 : i32, i32
  }
  func.func @transform_2(%arg0: i32) -> (i32, i32) {
    %c0_i32 = arith.constant 0 : i32
    %c0_i32_0 = arith.constant 0 : i32
    %c0_i32_1 = arith.constant 0 : i32
    return %c0_i32, %c0_i32_0 : i32, i32
  }
  func.func @transform_3(%arg0: i32) -> (i32, i32) {
    %c0_i32 = arith.constant 0 : i32
    %c0_i32_0 = arith.constant 0 : i32
    %c0_i32_1 = arith.constant 0 : i32
    return %c0_i32, %c0_i32_0 : i32, i32
  }
  func.func @transform_4(%arg0: i32) -> (i32, i32) {
    %c0_i32 = arith.constant 0 : i32
    %c0_i32_0 = arith.constant 0 : i32
    %c0_i32_1 = arith.constant 0 : i32
    return %c0_i32, %c0_i32_0 : i32, i32
  }
  func.func @transform_5(%arg0: i32) -> (i32, i32) {
    %c0_i32 = arith.constant 0 : i32
    %c0_i32_0 = arith.constant 0 : i32
    return %arg0, %c0_i32 : i32, i32
  }
}

</mosaic_0001>

<llo_original>
// kernel: critic_forward.1
$region0: #{critic_forward.1}
  #allocation0 [shape = 'u32[]', space=smem, size = 0x4, offset = 0x4, fixed_abs, tag = 'smem constant byte address 0x4 - core index']
  #allocation1 [shape = 'u32[144,128]{1,0:T(1,128)}', space=vmem, size = 0x12000, scoped, tag = 'internal scratch']
  #allocation2 [shape = 'f32[1,1]{1,0:T(1,128)S(6)}', space=smem, size = 0x200, scoped, tag = 'scoped memory for critic_forward.1']
  %s0 = inlined_call_operand.vmem [shape: f32[8,16], index: 0, kind: input, shape index: {}]
  %s1 = inlined_call_operand.vmem [shape: f32[16,32], index: 1, kind: input, shape index: {}]
  %s2 = inlined_call_operand.vmem [shape: f32[1,32], index: 2, kind: input, shape index: {}]
  %s3 = inlined_call_operand.vmem [shape: f32[32,1], index: 3, kind: input, shape index: {}]
  %s4 = inlined_call_operand.<no memory space> [shape: f32[1,1], index: 4, kind: input, shape index: {}]
  %s5 = inlined_call_operand.vmem [shape: f32[8,1], index: 5, kind: output, shape index: {}]
  %s6 = sld [smem:[#allocation0]]
  $region30: #{critic_forward.1} parent=0
    _
  %s8 = ssub.s32 1, %s6
  %s9 = scalar_select 0, %s8, %s6
  %10 = sst [smem:[#allocation2]] %s4
  // Predicated region
  $region2: #{critic_forward.1} parent=0 // pred_check
    _
  $region3: #{critic_forward.1} parent=0 // pred_check_branch
    %12 = sbr.rel (0) target = $region5
  $region4: #{critic_forward.1} parent=0 // pred_region
    _
  $region5: #{critic_forward.1} parent=0 // pred_fallthru
    _
  // Predicated region
  $region6: #{critic_forward.1} parent=0 // pred_check
    _
  $region7: #{critic_forward.1} parent=0 // pred_check_branch
    %14 = sbr.rel (0) target = $region9
  $region8: #{critic_forward.1} parent=0 // pred_region
    _
  $region9: #{critic_forward.1} parent=0 // pred_fallthru
    _
  // Predicated region
  $region10: #{critic_forward.1} parent=0 // pred_check
    _
  $region11: #{critic_forward.1} parent=0 // pred_check_branch
    %16 = sbr.rel (0) target = $region13
  $region12: #{critic_forward.1} parent=0 // pred_region
    _
  $region13: #{critic_forward.1} parent=0 // pred_fallthru
    _
  // Predicated region
  $region14: #{critic_forward.1} parent=0 // pred_check
    _
  $region15: #{critic_forward.1} parent=0 // pred_check_branch
    %18 = sbr.rel (0) target = $region17
  $region16: #{critic_forward.1} parent=0 // pred_region
    _
  $region17: #{critic_forward.1} parent=0 // pred_fallthru
    _
  // Predicated region
  $region18: #{critic_forward.1} parent=0 // pred_check
    _
  $region19: #{critic_forward.1} parent=0 // pred_check_branch
    %20 = sbr.rel (0) target = $region21
  $region20: #{critic_forward.1} parent=0 // pred_region
    _
  $region21: #{critic_forward.1} parent=0 // pred_fallthru
    _
  %v21 = vld [vmem:[%s0] sm:$0xff]
  %v22 = vld [vmem:[%s1] sm:$0xff]
  %v23 = vld [vmem:[%s1 + $0x8] sm:$0xff]
  %v24 = vld [vmem:[%s2] sm:$0x1]
  %v26 = vlaneseq
  %v27 = vshrl.u32 %v26, 7
  %v28 = vsub.s32 0, %v27
  %v29 = vrot.slane %v24, %v28
  %vm31 = vcmask 130048
  %v33 = vsel %vm31, %v21, 0
  %35 = vmatprep.subr.mxu0 0.0
  %36 = vmatpush1.msra.mxu0 %v22
  %37 = vmatprep.subr.mxu0 0.0
  %38 = vmatpush1.msra.mxu0 %v23
  %39 = vmatprep.subr.mxu0 0.0
  %40 = vmatpush1.msra.mxu0 0.0
  %41 = vmatprep.subr.mxu0 0.0
  %42 = vmatpush1.msra.mxu0 0.0
  %43 = vmatprep.subr.mxu0 0.0
  %44 = vmatpush1.msra.mxu0 0.0
  %45 = vmatprep.subr.mxu0 0.0
  %46 = vmatpush1.msra.mxu0 0.0
  %47 = vmatprep.subr.mxu0 0.0
  %48 = vmatpush1.msra.mxu0 0.0
  %49 = vmatprep.subr.mxu0 0.0
  %50 = vmatpush1.msra.mxu0 0.0
  %51 = vmatprep.subr.mxu0 0.0
  %52 = vmatpush1.msra.mxu0 0.0
  %53 = vmatprep.subr.mxu0 0.0
  %54 = vmatpush1.msra.mxu0 0.0
  %55 = vmatprep.subr.mxu0 0.0
  %56 = vmatpush1.msra.mxu0 0.0
  %57 = vmatprep.subr.mxu0 0.0
  %58 = vmatpush1.msra.mxu0 0.0
  %59 = vmatprep.subr.mxu0 0.0
  %60 = vmatpush1.msra.mxu0 0.0
  %61 = vmatprep.subr.mxu0 0.0
  %62 = vmatpush1.msra.mxu0 0.0
  %63 = vmatprep.subr.mxu0 0.0
  %64 = vmatpush1.msra.mxu0 0.0
  %65 = vmatprep.subr.mxu0 0.0
  %66 = vmatpush1.msra.mxu0 0.0
  %67 = vmatprep.subr.mxu0 0.0
  %68 = vmatpush1.msra.mxu0 0.0
  %69 = vmatprep.subr.mxu0 0.0
  %70 = vmatpush1.msra.mxu0 0.0
  %71 = vmatprep.subr.mxu0 0.0
  %72 = vmatpush1.msra.mxu0 0.0
  %73 = vmatprep.subr.mxu0 0.0
  %74 = vmatpush1.msra.mxu0 0.0
  %75 = vmatprep.subr.mxu0 0.0
  %76 = vmatpush1.msra.mxu0 0.0
  %77 = vmatprep.subr.mxu0 0.0
  %78 = vmatpush1.msra.mxu0 0.0
  %79 = vmatprep.subr.mxu0 0.0
  %80 = vmatpush1.msra.mxu0 0.0
  %81 = vmatprep.subr.mxu0 0.0
  %82 = vmatpush1.msra.mxu0 0.0
  %83 = vmatprep.subr.mxu0 0.0
  %84 = vmatpush1.msra.mxu0 0.0
  %85 = vmatprep.subr.mxu0 0.0
  %86 = vmatpush1.msra.mxu0 0.0
  %87 = vmatprep.subr.mxu0 0.0
  %88 = vmatpush1.msra.mxu0 0.0
  %89 = vmatprep.subr.mxu0 0.0
  %90 = vmatpush1.msra.mxu0 0.0
  %91 = vmatprep.subr.mxu0 0.0
  %92 = vmatpush1.msra.mxu0 0.0
  %93 = vmatprep.subr.mxu0 0.0
  %94 = vmatpush1.msra.mxu0 0.0
  %95 = vmatprep.subr.mxu0 0.0
  %96 = vmatpush1.msra.mxu0 0.0
  %97 = vmatprep.subr.mxu0 0.0
  %98 = vmatpush1.msra.mxu0 0.0
  %99 = vmatprep.mubr.f32.mxu0 0.0
  %100 = vmatmul.mubr.f32.gmra.mrb[0].mxu0 %v33
  %v101 = vpop.f32.mrb[0].mxu0
  %v102 = vadd.f32 %v29, %v101
  %v103 = vpop.f32.mrb[0].mxu0
  %104 = vdwg.mxu0
  %v105 = vtanh.pop %v102
  %v106 = vld [vmem:[%s3] sm:$0xff]
  %v107 = vld [vmem:[%s3 + $0x8] sm:$0xff]
  %v108 = vld [vmem:[%s3 + $0x10] sm:$0xff]
  %v109 = vld [vmem:[%s3 + $0x18] sm:$0xff]
  %s110 = sld [smem:[#allocation2]]
  %v111 = vstv %s110
  %vm112 = vcmask 261120
  %v114 = vsel %vm112, %v105, 0
  %116 = vmatprep.subr.mxu0 0.0
  %117 = vmatpush1.msra.mxu0 %v106
  %118 = vmatprep.subr.mxu0 0.0
  %119 = vmatpush1.msra.mxu0 %v107
  %120 = vmatprep.subr.mxu0 0.0
  %121 = vmatpush1.msra.mxu0 %v108
  %122 = vmatprep.subr.mxu0 0.0
  %123 = vmatpush1.msra.mxu0 %v109
  %124 = vmatprep.subr.mxu0 0.0
  %125 = vmatpush1.msra.mxu0 0.0
  %126 = vmatprep.subr.mxu0 0.0
  %127 = vmatpush1.msra.mxu0 0.0
  %128 = vmatprep.subr.mxu0 0.0
  %129 = vmatpush1.msra.mxu0 0.0
  %130 = vmatprep.subr.mxu0 0.0
  %131 = vmatpush1.msra.mxu0 0.0
  %132 = vmatprep.subr.mxu0 0.0
  %133 = vmatpush1.msra.mxu0 0.0
  %134 = vmatprep.subr.mxu0 0.0
  %135 = vmatpush1.msra.mxu0 0.0
  %136 = vmatprep.subr.mxu0 0.0
  %137 = vmatpush1.msra.mxu0 0.0
  %138 = vmatprep.subr.mxu0 0.0
  %139 = vmatpush1.msra.mxu0 0.0
  %140 = vmatprep.subr.mxu0 0.0
  %141 = vmatpush1.msra.mxu0 0.0
  %142 = vmatprep.subr.mxu0 0.0
  %143 = vmatpush1.msra.mxu0 0.0
  %144 = vmatprep.subr.mxu0 0.0
  %145 = vmatpush1.msra.mxu0 0.0
  %146 = vmatprep.subr.mxu0 0.0
  %147 = vmatpush1.msra.mxu0 0.0
  %148 = vmatprep.subr.mxu0 0.0
  %149 = vmatpush1.msra.mxu0 0.0
  %150 = vmatprep.subr.mxu0 0.0
  %151 = vmatpush1.msra.mxu0 0.0
  %152 = vmatprep.subr.mxu0 0.0
  %153 = vmatpush1.msra.mxu0 0.0
  %154 = vmatprep.subr.mxu0 0.0
  %155 = vmatpush1.msra.mxu0 0.0
  %156 = vmatprep.subr.mxu0 0.0
  %157 = vmatpush1.msra.mxu0 0.0
  %158 = vmatprep.subr.mxu0 0.0
  %159 = vmatpush1.msra.mxu0 0.0
  %160 = vmatprep.subr.mxu0 0.0
  %161 = vmatpush1.msra.mxu0 0.0
  %162 = vmatprep.subr.mxu0 0.0
  %163 = vmatpush1.msra.mxu0 0.0
  %164 = vmatprep.subr.mxu0 0.0
  %165 = vmatpush1.msra.mxu0 0.0
  %166 = vmatprep.subr.mxu0 0.0
  %167 = vmatpush1.msra.mxu0 0.0
  %168 = vmatprep.subr.mxu0 0.0
  %169 = vmatpush1.msra.mxu0 0.0
  %170 = vmatprep.subr.mxu0 0.0
  %171 = vmatpush1.msra.mxu0 0.0
  %172 = vmatprep.subr.mxu0 0.0
  %173 = vmatpush1.msra.mxu0 0.0
  %174 = vmatprep.subr.mxu0 0.0
  %175 = vmatpush1.msra.mxu0 0.0
  %176 = vmatprep.subr.mxu0 0.0
  %177 = vmatpush1.msra.mxu0 0.0
  %178 = vmatprep.subr.mxu0 0.0
  %179 = vmatpush1.msra.mxu0 0.0
  %180 = vmatprep.mubr.f32.mxu0 0.0
  %181 = vmatmul.mubr.f32.gmra.mrb[0].mxu0 %v114
  %v182 = vpop.f32.mrb[0].mxu0
  %v183 = vadd.f32 %v111, %v182
  %v184 = vpop.f32.mrb[0].mxu0
  %185 = vdwg.mxu0
  %vm186 = vcmask 7168
  %187 = vst.msk [vmem:[%s5] sm:$0xff] %vm186, %v183
  // Predicated region
  $region22: #{critic_forward.1} parent=0 // pred_check
    _
  $region23: #{critic_forward.1} parent=0 // pred_check_branch
    %189 = sbr.rel (0) target = $region25
  $region24: #{critic_forward.1} parent=0 // pred_region
    _
  $region25: #{critic_forward.1} parent=0 // pred_fallthru
    _
  // Predicated region
  $region26: #{critic_forward.1} parent=0 // pred_check
    _
  $region27: #{critic_forward.1} parent=0 // pred_check_branch
    %191 = sbr.rel (0) target = $region29
  $region28: #{critic_forward.1} parent=0 // pred_region
    _
  $region29: #{critic_forward.1} parent=0 // pred_fallthru
    _

</llo_original>
